<compile_context>
chip_gen: v7x
topology: tpu7x:2x2x1
jax: 0.10.0
libtpu: 0.0.40
codegen_flags: <defaults>
</compile_context>

<pallas_src>
import numpy as np
import jax
import jax.numpy as jnp
from jax.experimental import pallas as pl
from jax.experimental.pallas import tpu as pltpu


def _make_masks(H, W):
    """(9, H*W) int32 validity masks: 1 where the shifted source is in bounds."""
    hh, ww = np.meshgrid(np.arange(H), np.arange(W), indexing="ij")
    masks = np.zeros((9, H * W), dtype=np.int32)
    for cm in range(9):
        dh = cm // 3 - 1
        dw = cm % 3 - 1
        valid = ((hh + dh >= 0) & (hh + dh < H) &
                 (ww + dw >= 0) & (ww + dw < W))
        masks[cm] = valid.reshape(-1).astype(np.int32)
    return jnp.asarray(masks)


def _make_kernel(H, W):
    HW = H * W

    def kernel(mask_ref, x_ref, o_ref):
        # mask_ref: (9, HW) int32    x_ref / o_ref: (1, GBLK, 9*HW)
        for cm in range(9):                      # static: fully unrolled
            dh = cm // 3 - 1
            dw = cm % 3 - 1
            s = dh * W + dw                      # flat source offset
            lo = cm * HW
            hi = lo + HW
            seg = x_ref[0, :, lo:hi]             # (GBLK, HW), aligned slice
            if s == 0:                           # center tap: plain copy
                o_ref[0, :, lo:hi] = seg
            else:
                shifted = pltpu.roll(seg, shift=(-s) % HW, axis=1)
                m = mask_ref[cm:cm + 1, :] != 0  # (1, HW) bool, bcast on sublanes
                o_ref[0, :, lo:hi] = jnp.where(m, shifted,
                                               jnp.zeros_like(shifted))

    return kernel


def _pick_gblk(G, group_bytes, budget):
    """Largest channel-group block fitting the VMEM budget and the (8,128)
    block-shape rule (multiple of 8, or the whole G)."""
    if G * group_bytes <= budget:
        return G
    limit = max(1, budget // group_bytes)
    for cand in range((min(G, limit) // 8) * 8, 0, -8):
        if G % cand == 0:
            return cand
    return G                                     # fallback: single block


def shift3x3(x, *, block_bytes_budget=2 * 1024 * 1024):
    """Pallas implementation of Shift3x3.forward for an NCHW tensor."""
    N, C, H, W = x.shape
    dtype = x.dtype
    HW = H * W

    # TODO(synk): when C is not a multiple of 9 the channel axis is zero-padded
    # up to the next multiple of 9 (one extra HBM copy only in that case).
    C9 = -(-C // 9) * 9
    if C9 != C:
        x = jnp.pad(x, ((0, 0), (0, C9 - C), (0, 0), (0, 0)))
    G = C9 // 9

    xr = x.reshape(N, G, 9 * HW)                 # free reshape (contiguous)
    masks = _make_masks(H, W)
    gblk = _pick_gblk(G, 9 * HW * dtype.itemsize, block_bytes_budget)

    out = pl.pallas_call(
        _make_kernel(H, W),
        out_shape=jax.ShapeDtypeStruct((N, G, 9 * HW), dtype),
        grid_spec=pltpu.PrefetchScalarGridSpec(
            num_scalar_prefetch=0,
            grid=(N, G // gblk),
            in_specs=[
                pl.BlockSpec((9, HW), lambda n, g: (0, 0)),
                pl.BlockSpec((1, gblk, 9 * HW), lambda n, g: (n, g, 0)),
            ],
            out_specs=pl.BlockSpec((1, gblk, 9 * HW), lambda n, g: (n, g, 0)),
        ),
        compiler_params=pltpu.CompilerParams(
            dimension_semantics=("parallel", "parallel"),
            vmem_limit_bytes=32 * 1024 * 1024,
        ),
        cost_estimate=pl.CostEstimate(
            flops=0,
            transcendentals=0,
            bytes_accessed=2 * N * C9 * HW * dtype.itemsize,
        ),
    )(masks, xr)

    out = out.reshape(N, C9, H, W)
    if C9 != C:
        out = out[:, :C]
    return out


def _shift3x3_reference(x):
    """Pure-JAX reference for correctness checking."""
    N, C, H, W = x.shape
    xp = jnp.pad(x, ((0, 0), (0, 0), (1, 1), (1, 1)))
    outs = []
    for c in range(C):
        dh = (c % 9) // 3 - 1
        dw = (c % 9) % 3 - 1
        outs.append(xp[:, c, 1 + dh:1 + dh + H, 1 + dw:1 + dw + W])
    return jnp.stack(outs, axis=1)


if __name__ == "__main__":
    key = jax.random.PRNGKey(0)

    # 72 channels = 8 full modulo-9 cycles -> dense (multiple-of-8) sublane
    # blocks; still a small test tensor.
    N, C, H, W = 2, 72, 16, 16
    x = jax.random.normal(key, (N, C, H, W), dtype=jnp.float32)

    y = shift3x3(x)
    jax.block_until_ready(y)
    y_ref = _shift3x3_reference(x)
    assert y.shape == (N, C, H, W)
    assert y.dtype == jnp.float32
    assert bool(jnp.array_equal(y, y_ref)), "mismatch vs reference (C=72)"

    # Channel count that is not a multiple of 9 exercises the pad fallback.
    x2 = jax.random.normal(jax.random.PRNGKey(1), (2, 13, 16, 16), jnp.float32)
    y2 = shift3x3(x2)
    jax.block_until_ready(y2)
    assert bool(jnp.array_equal(y2, _shift3x3_reference(x2))), "mismatch (C=13)"

    print("KERNEL_OK")
</pallas_src>

<mosaic_0001>
module attributes {stable_mosaic.version = 11 : i64} {
  func.func @kernel(%arg0: i32, %arg1: i32, %arg2: memref<9x256xi32, #tpu.memory_space<vmem>>, %arg3: memref<1x8x2304xf32, #tpu.memory_space<vmem>>, %arg4: memref<1x8x2304xf32, #tpu.memory_space<vmem>>) attributes {dimension_semantics = [#tpu.dimension_semantics<parallel>, #tpu.dimension_semantics<parallel>], iteration_bounds = array<i64: 2, 1>, scalar_prefetch = 0 : i64, scratch_operands = 0 : i64, tpu.core_type = #tpu.core_type<tc>, window_params = [{pipeline_mode = #tpu.pipeline_mode<synchronous>, transform_indices = @transform_0, window_bounds = array<i64: 9, 256>}, {transform_indices = @transform_1, window_bounds = array<i64: 1, 8, 2304>}, {transform_indices = @transform_2, window_bounds = array<i64: 1, 8, 2304>}]} {
    %c0 = arith.constant 0 : index
    %c0_0 = arith.constant 0 : index
    %c0_1 = arith.constant 0 : index
    %0 = vector.load %arg3[%c0, %c0_0, %c0_1] : memref<1x8x2304xf32, #tpu.memory_space<vmem>>, vector<1x8x256xf32>
    %1 = vector.shape_cast %0 : vector<1x8x256xf32> to vector<8x256xf32>
    %c17_i32 = arith.constant 17 : i32
    %2 = tpu.dynamic_rotate %1 by %c17_i32 dim 1 : vector<8x256xf32>, i32 -> vector<8x256xf32>
    %c0_2 = arith.constant 0 : index
    %c0_3 = arith.constant 0 : index
    %3 = vector.load %arg2[%c0_2, %c0_3] : memref<9x256xi32, #tpu.memory_space<vmem>>, vector<1x256xi32>
    %c0_i32 = arith.constant 0 : i32
    %4 = vector.broadcast %c0_i32 : i32 to vector<1x256xi32>
    %5 = arith.cmpi ne, %3, %4 : vector<1x256xi32>
    %cst = arith.constant 0.000000e+00 : f32
    %6 = vector.broadcast %cst : f32 to vector<8x256xf32>
    %7 = vector.shape_cast %5 : vector<1x256xi1> to vector<1x256xi1>
    %8 = vector.broadcast %7 : vector<1x256xi1> to vector<8x256xi1>
    %9 = arith.select %8, %2, %6 : vector<8x256xi1>, vector<8x256xf32>
    %c0_4 = arith.constant 0 : index
    %c0_5 = arith.constant 0 : index
    %c0_6 = arith.constant 0 : index
    %10 = vector.load %arg4[%c0_4, %c0_5, %c0_6] : memref<1x8x2304xf32, #tpu.memory_space<vmem>>, vector<1x8x256xf32>
    %11 = vector.shape_cast %10 : vector<1x8x256xf32> to vector<8x256xf32>
    %12 = vector.shape_cast %9 : vector<8x256xf32> to vector<1x8x256xf32>
    tpu.vector_store %arg4[%c0_4, %c0_5, %c0_6], %12 {strides = array<i32>} : memref<1x8x2304xf32, #tpu.memory_space<vmem>>, vector<1x8x256xf32>,
    %c0_7 = arith.constant 0 : index
    %c0_8 = arith.constant 0 : index
    %c256 = arith.constant 256 : index
    %13 = vector.load %arg3[%c0_7, %c0_8, %c256] : memref<1x8x2304xf32, #tpu.memory_space<vmem>>, vector<1x8x256xf32>
    %14 = vector.shape_cast %13 : vector<1x8x256xf32> to vector<8x256xf32>
    %c16_i32 = arith.constant 16 : i32
    %15 = tpu.dynamic_rotate %14 by %c16_i32 dim 1 : vector<8x256xf32>, i32 -> vector<8x256xf32>
    %c1 = arith.constant 1 : index
    %c0_9 = arith.constant 0 : index
    %16 = vector.load %arg2[%c1, %c0_9] : memref<9x256xi32, #tpu.memory_space<vmem>>, vector<1x256xi32>
    %c0_i32_10 = arith.constant 0 : i32
    %17 = vector.broadcast %c0_i32_10 : i32 to vector<1x256xi32>
    %18 = arith.cmpi ne, %16, %17 : vector<1x256xi32>
    %cst_11 = arith.constant 0.000000e+00 : f32
    %19 = vector.broadcast %cst_11 : f32 to vector<8x256xf32>
    %20 = vector.shape_cast %18 : vector<1x256xi1> to vector<1x256xi1>
    %21 = vector.broadcast %20 : vector<1x256xi1> to vector<8x256xi1>
    %22 = arith.select %21, %15, %19 : vector<8x256xi1>, vector<8x256xf32>
    %c0_12 = arith.constant 0 : index
    %c0_13 = arith.constant 0 : index
    %c256_14 = arith.constant 256 : index
    %23 = vector.load %arg4[%c0_12, %c0_13, %c256_14] : memref<1x8x2304xf32, #tpu.memory_space<vmem>>, vector<1x8x256xf32>
    %24 = vector.shape_cast %23 : vector<1x8x256xf32> to vector<8x256xf32>
    %25 = vector.shape_cast %22 : vector<8x256xf32> to vector<1x8x256xf32>
    tpu.vector_store %arg4[%c0_12, %c0_13, %c256_14], %25 {strides = array<i32>} : memref<1x8x2304xf32, #tpu.memory_space<vmem>>, vector<1x8x256xf32>,
    %c0_15 = arith.constant 0 : index
    %c0_16 = arith.constant 0 : index
    %c512 = arith.constant 512 : index
    %26 = vector.load %arg3[%c0_15, %c0_16, %c512] : memref<1x8x2304xf32, #tpu.memory_space<vmem>>, vector<1x8x256xf32>
    %27 = vector.shape_cast %26 : vector<1x8x256xf32> to vector<8x256xf32>
    %c15_i32 = arith.constant 15 : i32
    %28 = tpu.dynamic_rotate %27 by %c15_i32 dim 1 : vector<8x256xf32>, i32 -> vector<8x256xf32>
    %c2 = arith.constant 2 : index
    %c0_17 = arith.constant 0 : index
    %29 = vector.load %arg2[%c2, %c0_17] : memref<9x256xi32, #tpu.memory_space<vmem>>, vector<1x256xi32>
    %c0_i32_18 = arith.constant 0 : i32
    %30 = vector.broadcast %c0_i32_18 : i32 to vector<1x256xi32>
    %31 = arith.cmpi ne, %29, %30 : vector<1x256xi32>
    %cst_19 = arith.constant 0.000000e+00 : f32
    %32 = vector.broadcast %cst_19 : f32 to vector<8x256xf32>
    %33 = vector.shape_cast %31 : vector<1x256xi1> to vector<1x256xi1>
    %34 = vector.broadcast %33 : vector<1x256xi1> to vector<8x256xi1>
    %35 = arith.select %34, %28, %32 : vector<8x256xi1>, vector<8x256xf32>
    %c0_20 = arith.constant 0 : index
    %c0_21 = arith.constant 0 : index
    %c512_22 = arith.constant 512 : index
    %36 = vector.load %arg4[%c0_20, %c0_21, %c512_22] : memref<1x8x2304xf32, #tpu.memory_space<vmem>>, vector<1x8x256xf32>
    %37 = vector.shape_cast %36 : vector<1x8x256xf32> to vector<8x256xf32>
    %38 = vector.shape_cast %35 : vector<8x256xf32> to vector<1x8x256xf32>
    tpu.vector_store %arg4[%c0_20, %c0_21, %c512_22], %38 {strides = array<i32>} : memref<1x8x2304xf32, #tpu.memory_space<vmem>>, vector<1x8x256xf32>,
    %c0_23 = arith.constant 0 : index
    %c0_24 = arith.constant 0 : index
    %c768 = arith.constant 768 : index
    %39 = vector.load %arg3[%c0_23, %c0_24, %c768] : memref<1x8x2304xf32, #tpu.memory_space<vmem>>, vector<1x8x256xf32>
    %40 = vector.shape_cast %39 : vector<1x8x256xf32> to vector<8x256xf32>
    %c1_i32 = arith.constant 1 : i32
    %41 = tpu.dynamic_rotate %40 by %c1_i32 dim 1 : vector<8x256xf32>, i32 -> vector<8x256xf32>
    %c3 = arith.constant 3 : index
    %c0_25 = arith.constant 0 : index
    %42 = vector.load %arg2[%c3, %c0_25] : memref<9x256xi32, #tpu.memory_space<vmem>>, vector<1x256xi32>
    %c0_i32_26 = arith.constant 0 : i32
    %43 = vector.broadcast %c0_i32_26 : i32 to vector<1x256xi32>
    %44 = arith.cmpi ne, %42, %43 : vector<1x256xi32>
    %cst_27 = arith.constant 0.000000e+00 : f32
    %45 = vector.broadcast %cst_27 : f32 to vector<8x256xf32>
    %46 = vector.shape_cast %44 : vector<1x256xi1> to vector<1x256xi1>
    %47 = vector.broadcast %46 : vector<1x256xi1> to vector<8x256xi1>
    %48 = arith.select %47, %41, %45 : vector<8x256xi1>, vector<8x256xf32>
    %c0_28 = arith.constant 0 : index
    %c0_29 = arith.constant 0 : index
    %c768_30 = arith.constant 768 : index
    %49 = vector.load %arg4[%c0_28, %c0_29, %c768_30] : memref<1x8x2304xf32, #tpu.memory_space<vmem>>, vector<1x8x256xf32>
    %50 = vector.shape_cast %49 : vector<1x8x256xf32> to vector<8x256xf32>
    %51 = vector.shape_cast %48 : vector<8x256xf32> to vector<1x8x256xf32>
    tpu.vector_store %arg4[%c0_28, %c0_29, %c768_30], %51 {strides = array<i32>} : memref<1x8x2304xf32, #tpu.memory_space<vmem>>, vector<1x8x256xf32>,
    %c0_31 = arith.constant 0 : index
    %c0_32 = arith.constant 0 : index
    %c1024 = arith.constant 1024 : index
    %52 = vector.load %arg3[%c0_31, %c0_32, %c1024] : memref<1x8x2304xf32, #tpu.memory_space<vmem>>, vector<1x8x256xf32>
    %53 = vector.shape_cast %52 : vector<1x8x256xf32> to vector<8x256xf32>
    %c0_33 = arith.constant 0 : index
    %c0_34 = arith.constant 0 : index
    %c1024_35 = arith.constant 1024 : index
    %54 = vector.load %arg4[%c0_33, %c0_34, %c1024_35] : memref<1x8x2304xf32, #tpu.memory_space<vmem>>, vector<1x8x256xf32>
    %55 = vector.shape_cast %54 : vector<1x8x256xf32> to vector<8x256xf32>
    %56 = vector.shape_cast %53 : vector<8x256xf32> to vector<1x8x256xf32>
    tpu.vector_store %arg4[%c0_33, %c0_34, %c1024_35], %56 {strides = array<i32>} : memref<1x8x2304xf32, #tpu.memory_space<vmem>>, vector<1x8x256xf32>,
    %c0_36 = arith.constant 0 : index
    %c0_37 = arith.constant 0 : index
    %c1280 = arith.constant 1280 : index
    %57 = vector.load %arg3[%c0_36, %c0_37, %c1280] : memref<1x8x2304xf32, #tpu.memory_space<vmem>>, vector<1x8x256xf32>
    %58 = vector.shape_cast %57 : vector<1x8x256xf32> to vector<8x256xf32>
    %c255_i32 = arith.constant 255 : i32
    %59 = tpu.dynamic_rotate %58 by %c255_i32 dim 1 : vector<8x256xf32>, i32 -> vector<8x256xf32>
    %c5 = arith.constant 5 : index
    %c0_38 = arith.constant 0 : index
    %60 = vector.load %arg2[%c5, %c0_38] : memref<9x256xi32, #tpu.memory_space<vmem>>, vector<1x256xi32>
    %c0_i32_39 = arith.constant 0 : i32
    %61 = vector.broadcast %c0_i32_39 : i32 to vector<1x256xi32>
    %62 = arith.cmpi ne, %60, %61 : vector<1x256xi32>
    %cst_40 = arith.constant 0.000000e+00 : f32
    %63 = vector.broadcast %cst_40 : f32 to vector<8x256xf32>
    %64 = vector.shape_cast %62 : vector<1x256xi1> to vector<1x256xi1>
    %65 = vector.broadcast %64 : vector<1x256xi1> to vector<8x256xi1>
    %66 = arith.select %65, %59, %63 : vector<8x256xi1>, vector<8x256xf32>
    %c0_41 = arith.constant 0 : index
    %c0_42 = arith.constant 0 : index
    %c1280_43 = arith.constant 1280 : index
    %67 = vector.load %arg4[%c0_41, %c0_42, %c1280_43] : memref<1x8x2304xf32, #tpu.memory_space<vmem>>, vector<1x8x256xf32>
    %68 = vector.shape_cast %67 : vector<1x8x256xf32> to vector<8x256xf32>
    %69 = vector.shape_cast %66 : vector<8x256xf32> to vector<1x8x256xf32>
    tpu.vector_store %arg4[%c0_41, %c0_42, %c1280_43], %69 {strides = array<i32>} : memref<1x8x2304xf32, #tpu.memory_space<vmem>>, vector<1x8x256xf32>,
    %c0_44 = arith.constant 0 : index
    %c0_45 = arith.constant 0 : index
    %c1536 = arith.constant 1536 : index
    %70 = vector.load %arg3[%c0_44, %c0_45, %c1536] : memref<1x8x2304xf32, #tpu.memory_space<vmem>>, vector<1x8x256xf32>
    %71 = vector.shape_cast %70 : vector<1x8x256xf32> to vector<8x256xf32>
    %c241_i32 = arith.constant 241 : i32
    %72 = tpu.dynamic_rotate %71 by %c241_i32 dim 1 : vector<8x256xf32>, i32 -> vector<8x256xf32>
    %c6 = arith.constant 6 : index
    %c0_46 = arith.constant 0 : index
    %73 = vector.load %arg2[%c6, %c0_46] : memref<9x256xi32, #tpu.memory_space<vmem>>, vector<1x256xi32>
    %c0_i32_47 = arith.constant 0 : i32
    %74 = vector.broadcast %c0_i32_47 : i32 to vector<1x256xi32>
    %75 = arith.cmpi ne, %73, %74 : vector<1x256xi32>
    %cst_48 = arith.constant 0.000000e+00 : f32
    %76 = vector.broadcast %cst_48 : f32 to vector<8x256xf32>
    %77 = vector.shape_cast %75 : vector<1x256xi1> to vector<1x256xi1>
    %78 = vector.broadcast %77 : vector<1x256xi1> to vector<8x256xi1>
    %79 = arith.select %78, %72, %76 : vector<8x256xi1>, vector<8x256xf32>
    %c0_49 = arith.constant 0 : index
    %c0_50 = arith.constant 0 : index
    %c1536_51 = arith.constant 1536 : index
    %80 = vector.load %arg4[%c0_49, %c0_50, %c1536_51] : memref<1x8x2304xf32, #tpu.memory_space<vmem>>, vector<1x8x256xf32>
    %81 = vector.shape_cast %80 : vector<1x8x256xf32> to vector<8x256xf32>
    %82 = vector.shape_cast %79 : vector<8x256xf32> to vector<1x8x256xf32>
    tpu.vector_store %arg4[%c0_49, %c0_50, %c1536_51], %82 {strides = array<i32>} : memref<1x8x2304xf32, #tpu.memory_space<vmem>>, vector<1x8x256xf32>,
    %c0_52 = arith.constant 0 : index
    %c0_53 = arith.constant 0 : index
    %c1792 = arith.constant 1792 : index
    %83 = vector.load %arg3[%c0_52, %c0_53, %c1792] : memref<1x8x2304xf32, #tpu.memory_space<vmem>>, vector<1x8x256xf32>
    %84 = vector.shape_cast %83 : vector<1x8x256xf32> to vector<8x256xf32>
    %c240_i32 = arith.constant 240 : i32
    %85 = tpu.dynamic_rotate %84 by %c240_i32 dim 1 : vector<8x256xf32>, i32 -> vector<8x256xf32>
    %c7 = arith.constant 7 : index
    %c0_54 = arith.constant 0 : index
    %86 = vector.load %arg2[%c7, %c0_54] : memref<9x256xi32, #tpu.memory_space<vmem>>, vector<1x256xi32>
    %c0_i32_55 = arith.constant 0 : i32
    %87 = vector.broadcast %c0_i32_55 : i32 to vector<1x256xi32>
    %88 = arith.cmpi ne, %86, %87 : vector<1x256xi32>
    %cst_56 = arith.constant 0.000000e+00 : f32
    %89 = vector.broadcast %cst_56 : f32 to vector<8x256xf32>
    %90 = vector.shape_cast %88 : vector<1x256xi1> to vector<1x256xi1>
    %91 = vector.broadcast %90 : vector<1x256xi1> to vector<8x256xi1>
    %92 = arith.select %91, %85, %89 : vector<8x256xi1>, vector<8x256xf32>
    %c0_57 = arith.constant 0 : index
    %c0_58 = arith.constant 0 : index
    %c1792_59 = arith.constant 1792 : index
    %93 = vector.load %arg4[%c0_57, %c0_58, %c1792_59] : memref<1x8x2304xf32, #tpu.memory_space<vmem>>, vector<1x8x256xf32>
    %94 = vector.shape_cast %93 : vector<1x8x256xf32> to vector<8x256xf32>
    %95 = vector.shape_cast %92 : vector<8x256xf32> to vector<1x8x256xf32>
    tpu.vector_store %arg4[%c0_57, %c0_58, %c1792_59], %95 {strides = array<i32>} : memref<1x8x2304xf32, #tpu.memory_space<vmem>>, vector<1x8x256xf32>,
    %c0_60 = arith.constant 0 : index
    %c0_61 = arith.constant 0 : index
    %c2048 = arith.constant 2048 : index
    %96 = vector.load %arg3[%c0_60, %c0_61, %c2048] : memref<1x8x2304xf32, #tpu.memory_space<vmem>>, vector<1x8x256xf32>
    %97 = vector.shape_cast %96 : vector<1x8x256xf32> to vector<8x256xf32>
    %c239_i32 = arith.constant 239 : i32
    %98 = tpu.dynamic_rotate %97 by %c239_i32 dim 1 : vector<8x256xf32>, i32 -> vector<8x256xf32>
    %c8 = arith.constant 8 : index
    %c0_62 = arith.constant 0 : index
    %99 = vector.load %arg2[%c8, %c0_62] : memref<9x256xi32, #tpu.memory_space<vmem>>, vector<1x256xi32>
    %c0_i32_63 = arith.constant 0 : i32
    %100 = vector.broadcast %c0_i32_63 : i32 to vector<1x256xi32>
    %101 = arith.cmpi ne, %99, %100 : vector<1x256xi32>
    %cst_64 = arith.constant 0.000000e+00 : f32
    %102 = vector.broadcast %cst_64 : f32 to vector<8x256xf32>
    %103 = vector.shape_cast %101 : vector<1x256xi1> to vector<1x256xi1>
    %104 = vector.broadcast %103 : vector<1x256xi1> to vector<8x256xi1>
    %105 = arith.select %104, %98, %102 : vector<8x256xi1>, vector<8x256xf32>
    %c0_65 = arith.constant 0 : index
    %c0_66 = arith.constant 0 : index
    %c2048_67 = arith.constant 2048 : index
    %106 = vector.load %arg4[%c0_65, %c0_66, %c2048_67] : memref<1x8x2304xf32, #tpu.memory_space<vmem>>, vector<1x8x256xf32>
    %107 = vector.shape_cast %106 : vector<1x8x256xf32> to vector<8x256xf32>
    %108 = vector.shape_cast %105 : vector<8x256xf32> to vector<1x8x256xf32>
    tpu.vector_store %arg4[%c0_65, %c0_66, %c2048_67], %108 {strides = array<i32>} : memref<1x8x2304xf32, #tpu.memory_space<vmem>>, vector<1x8x256xf32>,
    return
  }
  func.func @transform_0(%arg0: i32, %arg1: i32) -> (i32, i32) {
    %c0_i32 = arith.constant 0 : i32
    %c0_i32_0 = arith.constant 0 : i32
    %c0_i32_1 = arith.constant 0 : i32
    return %c0_i32, %c0_i32_0 : i32, i32
  }
  func.func @transform_1(%arg0: i32, %arg1: i32) -> (i32, i32, i32) {
    %c0_i32 = arith.constant 0 : i32
    %c0_i32_0 = arith.constant 0 : i32
    return %arg0, %arg1, %c0_i32 : i32, i32, i32
  }
  func.func @transform_2(%arg0: i32, %arg1: i32) -> (i32, i32, i32) {
    %c0_i32 = arith.constant 0 : i32
    %c0_i32_0 = arith.constant 0 : i32
    return %arg0, %arg1, %c0_i32 : i32, i32, i32
  }
}

</mosaic_0001>

<llo_original>
// kernel: tpu_custom_call.1
$region0: #{tpu_custom_call.1}
  #allocation0 [shape = 'u32[]', space=smem, size = 0x4, offset = 0x4, fixed_abs, tag = 'smem constant byte address 0x4 - core index']
  #allocation1 [shape = 'u32[144,128]{1,0:T(1,128)}', space=vmem, size = 0x12000, scoped, tag = 'internal scratch']
  %s0 = inlined_call_operand.hbm [shape: s32[9,256], index: 0, kind: input, shape index: {}]
  %s1 = inlined_call_operand.hbm [shape: f32[2,8,2304], index: 1, kind: input, shape index: {}]
  %s2 = inlined_call_operand.hbm [shape: f32[2,8,2304], index: 2, kind: output, shape index: {}]
  %s3 = sld [smem:[#allocation0]]
  $region49: #{tpu_custom_call.1} parent=0
    _
  %s5 = ssub.s32 1, %s3
  %s6 = scalar_select 0, %s5, %s3
  $region1: #{tpu_custom_call.1} parent=0
    #allocation2 [shape = 'u8[16384]{0}', space=vmem, size = 0x4000, scoped, tag = 'input window, operand 0, single buffered']
    #allocation3 [shape = 's32[2]{0}', space=sflag, size = 0x8, scoped, tag = 'scoped memory for tpu_custom_call.1']
    #allocation4 [shape = 's32[2]{0}', space=sflag, size = 0x8, scoped, tag = 'scoped memory for tpu_custom_call.1']
    #allocation5 [shape = 'u8[147456]{0}', space=vmem, size = 0x24000, scoped, tag = 'input window, operand 1']
    #allocation6 [shape = 's32[2]{0}', space=sflag, size = 0x8, scoped, tag = 'scoped memory for tpu_custom_call.1']
    #allocation7 [shape = 'u8[147456]{0}', space=vmem, size = 0x24000, scoped, tag = 'output window, operand 0']
    %7 = vsyncpa [#allocation3], 0
    %8 = vsyncpa [#allocation6], 0
    %s9 = scalar_lea.sflag [#allocation6], 1
    %10 = vsyncpa %s9, 0
    %11 = vsyncpa [#allocation4], 0
    %s12 = scalar_lea.sflag [#allocation4], 1
    %13 = vsyncpa %s12, 0
    loop: start=0, step=1, limit=4
    $region2: #{tpu_custom_call.1} parent=1 // loop_pre_header
      _
    $region3: #{tpu_custom_call.1} parent=1 // loop_header
      %s15 = sphi 0, %s19
      %p16 = scmp.ge.s32.totalorder %s15, 4
      %s22 = sphi 0, %s34
      %s23 = sphi 0, %s30
      %s24 = sphi 0, %s22
      %s25 = sphi 0, %s23
      %s26 = sphi 0, %s24
      %s27 = sphi 0, %s25
      %s35 = sphi 0, %s35
      %s37 = sphi 0, %s35
      %s38 = sphi 0, %s37
      %s52 = sphi 0, %s38
      %s60 = sphi 0, %s62
      %s63 = sphi 0, %s60
      %s64 = sphi 0, %s63
      %s80 = sphi 0, %s64
      %s88 = sphi 0, %s90
      %s91 = sphi 0, %s88
      %s92 = sphi 0, %s91
      %s108 = sphi 0, %s92
    $region4: #{tpu_custom_call.1} parent=1 // loop_header_branch
      %18 = sbr.rel (%p16) target = $region8
    $region5: #{tpu_custom_call.1} parent=1 // loop_body
      %s20 = ssub.s32 %s15, 1
      %s21 = ssub.s32 %s15, 2
      %s28 = sadd.s32 1, %s23
      %p29 = scmp.ge.s32.totalorder %s28, 1
      %s30 = scalar_select %p29, 0, %s28
      %s31 = sadd.s32 1, %s22
      %s32 = scalar_select %p29, %s31, %s22
      %p33 = scmp.ge.s32.totalorder %s32, 2
      %s34 = scalar_select %p33, 0, %s32
      %s36 = sadd.s32 %s35, 1
      %p39 = scmp.eq.s32.totalorder %s15, 1
      %p40 = scmp.ne.s32.totalorder %s35, %s37
      %p41 = scmp.eq.s32.totalorder %s15, 0
      %p42 = por %p40, %p41
      %p43 = scmp.ne.s32.totalorder %s35, %s37
      %p44 = scmp.eq.s32.totalorder %s20, 1
      %p45 = por %p43, %p44
      %p46 = scmp.ne.s32.totalorder %s37, %s38
      %p47 = scmp.eq.s32.totalorder %s20, 0
      %p48 = por %p46, %p47
      %p49 = scmp.ne.s32.totalorder %s37, %s38
      %p50 = scmp.eq.s32.totalorder %s21, 1
      %p51 = por %p49, %p50
      %p53 = scmp.ne.s32.totalorder %s38, %s52
      %p54 = scmp.eq.s32.totalorder %s21, 0
      %p55 = por %p53, %p54
      %s56 = ssub.s32 %s22, %s34
      %s57 = ssub.s32 %s23, %s30
      %s58 = sor.u32 %s56, %s57
      %p59 = scmp.eq.s32.totalorder %s58, 0
      %s61 = sadd.s32 %s60, 1
      %s62 = scalar_select %p59, %s60, %s61
      %p65 = pneg %p59
      %p66 = scmp.eq.s32.totalorder %s15, 1
      %p67 = por %p65, %p66
      %p68 = scmp.ne.s32.totalorder %s60, %s63
      %p69 = scmp.eq.s32.totalorder %s15, 0
      %p70 = por %p68, %p69
      %p71 = scmp.ne.s32.totalorder %s60, %s63
      %p72 = scmp.eq.s32.totalorder %s20, 1
      %p73 = por %p71, %p72
      %p74 = scmp.ne.s32.totalorder %s63, %s64
      %p75 = scmp.eq.s32.totalorder %s20, 0
      %p76 = por %p74, %p75
      %p77 = scmp.ne.s32.totalorder %s63, %s64
      %p78 = scmp.eq.s32.totalorder %s21, 1
      %p79 = por %p77, %p78
      %p81 = scmp.ne.s32.totalorder %s64, %s80
      %p82 = scmp.eq.s32.totalorder %s21, 0
      %p83 = por %p81, %p82
      %s84 = ssub.s32 %s22, %s34
      %s85 = ssub.s32 %s23, %s30
      %s86 = sor.u32 %s84, %s85
      %p87 = scmp.eq.s32.totalorder %s86, 0
      %s89 = sadd.s32 %s88, 1
      %s90 = scalar_select %p87, %s88, %s89
      %p93 = pneg %p87
      %p94 = scmp.eq.s32.totalorder %s15, 1
      %p95 = por %p93, %p94
      %p96 = scmp.ne.s32.totalorder %s88, %s91
      %p97 = scmp.eq.s32.totalorder %s15, 0
      %p98 = por %p96, %p97
      %p99 = scmp.ne.s32.totalorder %s88, %s91
      %p100 = scmp.eq.s32.totalorder %s20, 1
      %p101 = por %p99, %p100
      %p102 = scmp.ne.s32.totalorder %s91, %s92
      %p103 = scmp.eq.s32.totalorder %s20, 0
      %p104 = por %p102, %p103
      %p105 = scmp.ne.s32.totalorder %s91, %s92
      %p106 = scmp.eq.s32.totalorder %s21, 1
      %p107 = por %p105, %p106
      %p109 = scmp.ne.s32.totalorder %s92, %s108
      %p110 = scmp.eq.s32.totalorder %s21, 0
      %p111 = por %p109, %p110
      %p112 = scmp.le.s32.totalorder 1, %s15
      %p113 = scmp.lt.s32.totalorder %s15, 3
      %p114 = pnand %p112, %p113
      %p115 = pneg %p114
      // Predicated region
      $region9: #{tpu_custom_call.1} parent=5 // pred_check
        _
      $region10: #{tpu_custom_call.1} parent=5 // pred_check_branch
        %117 = sbr.rel (%p114) target = $region12
      $region11: #{tpu_custom_call.1} parent=5 // pred_region
        %s118 = ssub.s32 %s15, 1
        // Predicated region
        $region13: #{tpu_custom_call.1} parent=11 // pred_check
          %p119 = pneg %p48
        $region14: #{tpu_custom_call.1} parent=11 // pred_check_branch
          %121 = sbr.rel (%p119) target = $region16
        $region15: #{tpu_custom_call.1} parent=11 // pred_region
          %s123 = ssub.s32 512, 512
          %124 = vsyncadd [#allocation3], %s123
          %s125 = sshll.u32 [#allocation2], 4
          %s126 = int_to_ptr.vmem [resolvable:$true] %s125
          %131 = dma.hbm_to_vmem [thread:$0]  %s0, 512, %s126, [#allocation3], 256, 256, 16
        $region16: #{tpu_custom_call.1} parent=11 // pred_fallthru
          _
      $region12: #{tpu_custom_call.1} parent=5 // pred_fallthru
        _
      %p132 = scmp.lt.s32.totalorder %s15, 2
      // Predicated region
      $region17: #{tpu_custom_call.1} parent=5 // pred_check
        %p133 = pneg %p132
      $region18: #{tpu_custom_call.1} parent=5 // pred_check_branch
        %135 = sbr.rel (%p133) target = $region20
      $region19: #{tpu_custom_call.1} parent=5 // pred_region
        // Predicated region
        $region21: #{tpu_custom_call.1} parent=19 // pred_check
          %p136 = pneg %p70
        $region22: #{tpu_custom_call.1} parent=19 // pred_check_branch
          %138 = sbr.rel (%p136) target = $region24
        $region23: #{tpu_custom_call.1} parent=19 // pred_region
          %s139 = sand.u32 %s60, 1
          %s140 = scalar_lea.sflag [#allocation6], %s139
          %s141 = sand.u32 %s60, 1
          %s142 = smul.addr %s141, 144
          %s143 = scalar_lea.vmem [#allocation5], %s142
          %s145 = ssub.s32 2304, 2304
          %146 = vsyncadd %s140, %s145
          %s147 = smul.addr %s23, 18
          %s148 = smul.addr %s22, 18
          %s149 = sadd.s32 %s147, %s148
          %s150 = smul.addr %s149, 128
          %s151 = scalar_lea.hbm %s1, %s150
          %s153 = sshll.u32 %s143, 4
          %s154 = int_to_ptr.vmem [resolvable:$true] %s153
          %156 = dma.hbm_to_vmem [thread:$0]  %s151, 2304, %s154, %s140
        $region24: #{tpu_custom_call.1} parent=19 // pred_fallthru
          _
      $region20: #{tpu_custom_call.1} parent=5 // pred_fallthru
        _
      %p157 = scmp.le.s32.totalorder 1, %s15
      %p158 = scmp.lt.s32.totalorder %s15, 3
      %p159 = pnand %p157, %p158
      %p160 = pneg %p159
      // Predicated region
      $region25: #{tpu_custom_call.1} parent=5 // pred_check
        _
      $region26: #{tpu_custom_call.1} parent=5 // pred_check_branch
        %162 = sbr.rel (%p159) target = $region28
      $region27: #{tpu_custom_call.1} parent=5 // pred_region
        %s163 = ssub.s32 %s15, 1
        // Predicated region
        $region29: #{tpu_custom_call.1} parent=27 // pred_check
          %p164 = pneg %p48
        $region30: #{tpu_custom_call.1} parent=27 // pred_check_branch
          %166 = sbr.rel (%p164) target = $region32
        $region31: #{tpu_custom_call.1} parent=27 // pred_region
          %167 = dma.done [#allocation3], 512
        $region32: #{tpu_custom_call.1} parent=27 // pred_fallthru
          _
        %s168 = sand.u32 %s63, 1
        %s169 = scalar_lea.sflag [#allocation6], %s168
        %s170 = sand.u32 %s63, 1
        %s171 = smul.addr %s170, 144
        %s172 = scalar_lea.vmem [#allocation5], %s171
        // Predicated region
        $region33: #{tpu_custom_call.1} parent=27 // pred_check
          %p173 = pneg %p76
        $region34: #{tpu_custom_call.1} parent=27 // pred_check_branch
          %175 = sbr.rel (%p173) target = $region36
        $region35: #{tpu_custom_call.1} parent=27 // pred_region
          %176 = dma.done %s169, 2304
        $region36: #{tpu_custom_call.1} parent=27 // pred_fallthru
          _
        %p177 = pneg %p48
        %p178 = pneg %p45
        %s179 = sand.u32 %s63, 1
        %s180 = scalar_lea.sflag [#allocation6], %s179
        %s181 = sand.u32 %s63, 1
        %s182 = smul.addr %s181, 144
        %s183 = scalar_lea.vmem [#allocation5], %s182
        %p184 = pneg %p76
        %p185 = pneg %p73
        %p186 = pneg %p104
        %p187 = pneg %p101
        %s188 = sand.u32 %s91, 1
        %s189 = scalar_lea.sflag [#allocation4], %s188
        %s190 = sand.u32 %s91, 1
        %s191 = smul.addr %s190, 144
        %s192 = scalar_lea.vmem [#allocation7], %s191
        %v193 = vld [vmem:[%s172] sm:$0xff]
        %v194 = vld [vmem:[%s172 + $0x8] sm:$0xff]
        %195 = vrot.lane.b32.xlu0 %v193, 17
        %v196 = vpop.permute.xlu0 %195
        %197 = vrot.lane.b32.xlu0 %v194, 17
        %v198 = vpop.permute.xlu0 %197
        %v199 = vlaneseq
        %v200 = vand.u32 %v199, 127
        %vm201 = vcmp.lt.s32.totalorder %v200, 17
        %v202 = vsel %vm201, %v196, %v198
        %v203 = vsel %vm201, %v198, %v196
        %v204 = vld [vmem:[#allocation2] ss:$8 sm:$0x3]
        %vm205 = vcmp.ne.s32.totalorder %v204, 0
        %v206 = vsel %vm205, 1, 0
        %v207 = vlaneseq
        %v208 = vshrl.u32 %v207, 7
        %v209 = vsub.s32 0, %v208
        %v210 = vrot.slane %v206, %v209
        %v211 = vlaneseq
        %v212 = vshrl.u32 %v211, 7
        %v213 = vsub.s32 1, %v212
        %v214 = vrot.slane %v206, %v213
        %vm215 = vcmp.eq.s32.totalorder %v210, 1
        %vm216 = vcmp.eq.s32.totalorder %v214, 1
        %v217 = vsel %vm215, %v203, 0.0
        %v218 = vsel %vm216, %v202, 0.0
        %219 = vst [vmem:[%s192] sm:$0xff] %v217
        %220 = vst [vmem:[%s192 + $0x8] sm:$0xff] %v218
        %v221 = vld [vmem:[%s172 + $0x10] sm:$0xff]
        %v222 = vld [vmem:[%s172 + $0x18] sm:$0xff]
        %223 = vrot.lane.b32.xlu0 %v221, 16
        %v224 = vpop.permute.xlu0 %223
        %225 = vrot.lane.b32.xlu0 %v222, 16
        %v226 = vpop.permute.xlu0 %225
        %vm227 = vcmp.lt.s32.totalorder %v200, 16
        %v228 = vsel %vm227, %v224, %v226
        %v229 = vsel %vm227, %v226, %v224
        %s230 = scalar_lea.vmem [#allocation2], 1
        %v231 = vld [vmem:[%s230] ss:$8 sm:$0x3]
        %vm232 = vcmp.ne.s32.totalorder %v231, 0
        %v233 = vsel %vm232, 1, 0
        %v234 = vlaneseq
        %v235 = vshrl.u32 %v234, 7
        %v236 = vsub.s32 0, %v235
        %v237 = vrot.slane %v233, %v236
        %v238 = vlaneseq
        %v239 = vshrl.u32 %v238, 7
        %v240 = vsub.s32 1, %v239
        %v241 = vrot.slane %v233, %v240
        %vm242 = vcmp.eq.s32.totalorder %v237, 1
        %vm243 = vcmp.eq.s32.totalorder %v241, 1
        %v244 = vsel %vm242, %v229, 0.0
        %v245 = vsel %vm243, %v228, 0.0
        %246 = vst [vmem:[%s192 + $0x10] sm:$0xff] %v244
        %247 = vst [vmem:[%s192 + $0x18] sm:$0xff] %v245
        %v248 = vld [vmem:[%s172 + $0x20] sm:$0xff]
        %v249 = vld [vmem:[%s172 + $0x28] sm:$0xff]
        %250 = vrot.lane.b32.xlu0 %v248, 15
        %v251 = vpop.permute.xlu0 %250
        %252 = vrot.lane.b32.xlu0 %v249, 15
        %v253 = vpop.permute.xlu0 %252
        %vm254 = vcmp.lt.s32.totalorder %v200, 15
        %v255 = vsel %vm254, %v251, %v253
        %v256 = vsel %vm254, %v253, %v251
        %s257 = scalar_lea.vmem [#allocation2], 2
        %v258 = vld [vmem:[%s257] ss:$8 sm:$0x3]
        %vm259 = vcmp.ne.s32.totalorder %v258, 0
        %v260 = vsel %vm259, 1, 0
        %v261 = vlaneseq
        %v262 = vshrl.u32 %v261, 7
        %v263 = vsub.s32 0, %v262
        %v264 = vrot.slane %v260, %v263
        %v265 = vlaneseq
        %v266 = vshrl.u32 %v265, 7
        %v267 = vsub.s32 1, %v266
        %v268 = vrot.slane %v260, %v267
        %vm269 = vcmp.eq.s32.totalorder %v264, 1
        %vm270 = vcmp.eq.s32.totalorder %v268, 1
        %v271 = vsel %vm269, %v256, 0.0
        %v272 = vsel %vm270, %v255, 0.0
        %273 = vst [vmem:[%s192 + $0x20] sm:$0xff] %v271
        %274 = vst [vmem:[%s192 + $0x28] sm:$0xff] %v272
        %v275 = vld [vmem:[%s172 + $0x30] sm:$0xff]
        %v276 = vld [vmem:[%s172 + $0x38] sm:$0xff]
        %277 = vrot.lane.b32.xlu0 %v275, 1
        %v278 = vpop.permute.xlu0 %277
        %279 = vrot.lane.b32.xlu0 %v276, 1
        %v280 = vpop.permute.xlu0 %279
        %vm281 = vcmp.lt.s32.totalorder %v200, 1
        %v282 = vsel %vm281, %v278, %v280
        %v283 = vsel %vm281, %v280, %v278
        %s284 = scalar_lea.vmem [#allocation2], 3
        %v285 = vld [vmem:[%s284] ss:$8 sm:$0x3]
        %vm286 = vcmp.ne.s32.totalorder %v285, 0
        %v287 = vsel %vm286, 1, 0
        %v288 = vlaneseq
        %v289 = vshrl.u32 %v288, 7
        %v290 = vsub.s32 0, %v289
        %v291 = vrot.slane %v287, %v290
        %v292 = vlaneseq
        %v293 = vshrl.u32 %v292, 7
        %v294 = vsub.s32 1, %v293
        %v295 = vrot.slane %v287, %v294
        %vm296 = vcmp.eq.s32.totalorder %v291, 1
        %vm297 = vcmp.eq.s32.totalorder %v295, 1
        %v298 = vsel %vm296, %v283, 0.0
        %v299 = vsel %vm297, %v282, 0.0
        %300 = vst [vmem:[%s192 + $0x30] sm:$0xff] %v298
        %301 = vst [vmem:[%s192 + $0x38] sm:$0xff] %v299
        %v302 = vld [vmem:[%s172 + $0x40] sm:$0xff]
        %v303 = vld [vmem:[%s172 + $0x48] sm:$0xff]
        %304 = vst [vmem:[%s192 + $0x40] sm:$0xff] %v302
        %305 = vst [vmem:[%s192 + $0x48] sm:$0xff] %v303
        %v306 = vld [vmem:[%s172 + $0x50] sm:$0xff]
        %v307 = vld [vmem:[%s172 + $0x58] sm:$0xff]
        %308 = vrot.lane.b32.xlu0 %v306, 127
        %v309 = vpop.permute.xlu0 %308
        %310 = vrot.lane.b32.xlu0 %v307, 127
        %v311 = vpop.permute.xlu0 %310
        %vm312 = vcmp.lt.s32.totalorder %v200, 127
        %v313 = vsel %vm312, %v309, %v311
        %v314 = vsel %vm312, %v311, %v309
        %s315 = scalar_lea.vmem [#allocation2], 5
        %v316 = vld [vmem:[%s315] ss:$8 sm:$0x3]
        %vm317 = vcmp.ne.s32.totalorder %v316, 0
        %v318 = vsel %vm317, 1, 0
        %v319 = vlaneseq
        %v320 = vshrl.u32 %v319, 7
        %v321 = vsub.s32 0, %v320
        %v322 = vrot.slane %v318, %v321
        %v323 = vlaneseq
        %v324 = vshrl.u32 %v323, 7
        %v325 = vsub.s32 1, %v324
        %v326 = vrot.slane %v318, %v325
        %vm327 = vcmp.eq.s32.totalorder %v322, 1
        %vm328 = vcmp.eq.s32.totalorder %v326, 1
        %v329 = vsel %vm327, %v313, 0.0
        %v330 = vsel %vm328, %v314, 0.0
        %331 = vst [vmem:[%s192 + $0x50] sm:$0xff] %v329
        %332 = vst [vmem:[%s192 + $0x58] sm:$0xff] %v330
        %v333 = vld [vmem:[%s172 + $0x60] sm:$0xff]
        %v334 = vld [vmem:[%s172 + $0x68] sm:$0xff]
        %335 = vrot.lane.b32.xlu0 %v333, 113
        %v336 = vpop.permute.xlu0 %335
        %337 = vrot.lane.b32.xlu0 %v334, 113
        %v338 = vpop.permute.xlu0 %337
        %vm339 = vcmp.lt.s32.totalorder %v200, 113
        %v340 = vsel %vm339, %v336, %v338
        %v341 = vsel %vm339, %v338, %v336
        %s342 = scalar_lea.vmem [#allocation2], 6
        %v343 = vld [vmem:[%s342] ss:$8 sm:$0x3]
        %vm344 = vcmp.ne.s32.totalorder %v343, 0
        %v345 = vsel %vm344, 1, 0
        %v346 = vlaneseq
        %v347 = vshrl.u32 %v346, 7
        %v348 = vsub.s32 0, %v347
        %v349 = vrot.slane %v345, %v348
        %v350 = vlaneseq
        %v351 = vshrl.u32 %v350, 7
        %v352 = vsub.s32 1, %v351
        %v353 = vrot.slane %v345, %v352
        %vm354 = vcmp.eq.s32.totalorder %v349, 1
        %vm355 = vcmp.eq.s32.totalorder %v353, 1
        %v356 = vsel %vm354, %v340, 0.0
        %v357 = vsel %vm355, %v341, 0.0
        %358 = vst [vmem:[%s192 + $0x60] sm:$0xff] %v356
        %359 = vst [vmem:[%s192 + $0x68] sm:$0xff] %v357
        %v360 = vld [vmem:[%s172 + $0x70] sm:$0xff]
        %v361 = vld [vmem:[%s172 + $0x78] sm:$0xff]
        %362 = vrot.lane.b32.xlu0 %v360, 112
        %v363 = vpop.permute.xlu0 %362
        %364 = vrot.lane.b32.xlu0 %v361, 112
        %v365 = vpop.permute.xlu0 %364
        %vm366 = vcmp.lt.s32.totalorder %v200, 112
        %v367 = vsel %vm366, %v363, %v365
        %v368 = vsel %vm366, %v365, %v363
        %s369 = scalar_lea.vmem [#allocation2], 7
        %v370 = vld [vmem:[%s369] ss:$8 sm:$0x3]
        %vm371 = vcmp.ne.s32.totalorder %v370, 0
        %v372 = vsel %vm371, 1, 0
        %v373 = vlaneseq
        %v374 = vshrl.u32 %v373, 7
        %v375 = vsub.s32 0, %v374
        %v376 = vrot.slane %v372, %v375
        %v377 = vlaneseq
        %v378 = vshrl.u32 %v377, 7
        %v379 = vsub.s32 1, %v378
        %v380 = vrot.slane %v372, %v379
        %vm381 = vcmp.eq.s32.totalorder %v376, 1
        %vm382 = vcmp.eq.s32.totalorder %v380, 1
        %v383 = vsel %vm381, %v367, 0.0
        %v384 = vsel %vm382, %v368, 0.0
        %385 = vst [vmem:[%s192 + $0x70] sm:$0xff] %v383
        %386 = vst [vmem:[%s192 + $0x78] sm:$0xff] %v384
        %v387 = vld [vmem:[%s172 + $0x80] sm:$0xff]
        %v388 = vld [vmem:[%s172 + $0x88] sm:$0xff]
        %389 = vrot.lane.b32.xlu0 %v387, 111
        %v390 = vpop.permute.xlu0 %389
        %391 = vrot.lane.b32.xlu0 %v388, 111
        %v392 = vpop.permute.xlu0 %391
        %vm393 = vcmp.lt.s32.totalorder %v200, 111
        %v394 = vsel %vm393, %v390, %v392
        %v395 = vsel %vm393, %v392, %v390
        %s396 = scalar_lea.vmem [#allocation2], 16
        %v397 = vld [vmem:[%s396] ss:$8 sm:$0x3]
        %vm398 = vcmp.ne.s32.totalorder %v397, 0
        %v399 = vsel %vm398, 1, 0
        %v400 = vlaneseq
        %v401 = vshrl.u32 %v400, 7
        %v402 = vsub.s32 0, %v401
        %v403 = vrot.slane %v399, %v402
        %v404 = vlaneseq
        %v405 = vshrl.u32 %v404, 7
        %v406 = vsub.s32 1, %v405
        %v407 = vrot.slane %v399, %v406
        %vm408 = vcmp.eq.s32.totalorder %v403, 1
        %vm409 = vcmp.eq.s32.totalorder %v407, 1
        %v410 = vsel %vm408, %v394, 0.0
        %v411 = vsel %vm409, %v395, 0.0
        %412 = vst [vmem:[%s192 + $0x80] sm:$0xff] %v410
        %413 = vst [vmem:[%s192 + $0x88] sm:$0xff] %v411
        %s414 = sand.u32 %s91, 1
        %s415 = scalar_lea.sflag [#allocation4], %s414
        %s416 = sand.u32 %s91, 1
        %s417 = smul.addr %s416, 144
        %s418 = scalar_lea.vmem [#allocation7], %s417
        // Predicated region
        $region37: #{tpu_custom_call.1} parent=27 // pred_check
          %p419 = pneg %p101
        $region38: #{tpu_custom_call.1} parent=27 // pred_check_branch
          %421 = sbr.rel (%p419) target = $region40
        $region39: #{tpu_custom_call.1} parent=27 // pred_region
          %s423 = ssub.s32 2304, 2304
          %424 = vsyncadd %s415, %s423
          %s425 = smul.addr %s25, 18
          %s426 = smul.addr %s24, 18
          %s427 = sadd.s32 %s425, %s426
          %s428 = smul.addr %s427, 128
          %s429 = scalar_lea.hbm %s2, %s428
          %s431 = sshll.u32 %s418, 4
          %s432 = int_to_ptr.vmem [resolvable:$true] %s431
          %434 = dma.vmem_to_hbm [thread:$0]  %s432, 2304, %s429, %s415
        $region40: #{tpu_custom_call.1} parent=27 // pred_fallthru
          _
      $region28: #{tpu_custom_call.1} parent=5 // pred_fallthru
        _
      %p435 = scmp.le.s32.totalorder 2, %s15
      // Predicated region
      $region41: #{tpu_custom_call.1} parent=5 // pred_check
        %p436 = pneg %p435
      $region42: #{tpu_custom_call.1} parent=5 // pred_check_branch
        %438 = sbr.rel (%p436) target = $region44
      $region43: #{tpu_custom_call.1} parent=5 // pred_region
        %s439 = ssub.s32 %s15, 2
        // Predicated region
        $region45: #{tpu_custom_call.1} parent=43 // pred_check
          %p440 = pneg %p107
        $region46: #{tpu_custom_call.1} parent=43 // pred_check_branch
          %442 = sbr.rel (%p440) target = $region48
        $region47: #{tpu_custom_call.1} parent=43 // pred_region
          %s443 = sand.u32 %s92, 1
          %s444 = scalar_lea.sflag [#allocation4], %s443
          %s445 = sand.u32 %s92, 1
          %s446 = smul.addr %s445, 144
          %s447 = scalar_lea.vmem [#allocation7], %s446
          %448 = dma.done %s444, 2304
        $region48: #{tpu_custom_call.1} parent=43 // pred_fallthru
          _
      $region44: #{tpu_custom_call.1} parent=5 // pred_fallthru
        _
    $region6: #{tpu_custom_call.1} parent=1 // loop_footer
      %s19 = sadd.s32 1, %s15
    $region7: #{tpu_custom_call.1} parent=1 // loop_footer_branch
      %14 = sbr.rel target = $region3
    $region8: #{tpu_custom_call.1} parent=1 // loop_exit
      _
    %449 = vsyncpa [#allocation3], 1
    %s450 = scalar_lea.sflag [#allocation3], 1
    %451 = vsyncpa %s450, 1
    %452 = vsyncpa [#allocation6], 1
    %s453 = scalar_lea.sflag [#allocation6], 1
    %454 = vsyncpa %s453, 1
    %455 = vsyncpa [#allocation4], 1
    %s456 = scalar_lea.sflag [#allocation4], 1
    %457 = vsyncpa %s456, 1

</llo_original>
